<compile_context>
chip_gen: v5e
topology: v5e:2x2
jax: 0.10.0
libtpu: 0.0.40
codegen_flags: <defaults>
</compile_context>

<pallas_src>
import jax
import jax.numpy as jnp
from jax.experimental import pallas as pl
from jax.experimental.pallas import tpu as pltpu


def _fake_param_kernel(p_ref, o_ref):
    # p_ref: 1-D SMEM scalar of shape (1,); o_ref: VMEM tile of shape (8, 128).
    # Broadcast the scalar without reading the (uninitialized) output tile:
    # a single unmasked full-vreg store, the architecture floor on all gens.
    o_ref[...] = jnp.full(o_ref.shape, p_ref[0], dtype=o_ref.dtype)


@jax.jit
def _run_fake_param_kernel(fake_param):
    # One-shot sanity probe: broadcast the scalar parameter over a single
    # TPU-aligned, lane-dense (8, 128) f32 vreg.  jit caches the pallas_call
    # dispatch so the Mosaic compile happens exactly once.
    p = jnp.reshape(fake_param, (1,)).astype(jnp.float32)  # f32[1] -> 4 B SMEM
    return pl.pallas_call(
        _fake_param_kernel,
        out_shape=jax.ShapeDtypeStruct((8, 128), jnp.float32),
        in_specs=[pl.BlockSpec(memory_space=pltpu.SMEM)],
        out_specs=pl.BlockSpec(memory_space=pltpu.VMEM),
        # Intentionally no grid / dimension_semantics / compiler_params:
        # 4 KiB of output has nothing to pipeline or shard across cores.
    )(p)


class DummyModule:
    """JAX/Pallas port of tests/python/ds_inference.py::DummyModule."""

    def __init__(self):
        # torch.nn.Parameter(torch.tensor(0.0)) -> deterministic scalar init.
        self.fake_param = jnp.asarray(0.0, dtype=jnp.float32)

    def forward(self, *args, **kwargs):
        # The reference forward performs no computation and returns None.
        # Per performance review: keep this a pure Python no-op — no kernel
        # launch, no host sync.  Any reintroduction would re-add ~µs-scale
        # dispatch plus a device round-trip per call on every TPU generation.
        # TODO(synk): there is no hot path to port; the parameter-broadcast
        # kernel exists only as an out-of-band, one-shot sanity probe.
        return None

    __call__ = forward


if __name__ == "__main__":
    key = jax.random.PRNGKey(0)
    # Example inputs (ignored by the module, exactly as in the PyTorch reference).
    x = jax.random.normal(key, (2, 4, 16, 16), dtype=jnp.float32)

    mod = DummyModule()

    # Run the underlying kernel exactly once (smoke test), block on the result,
    # and sanity-check it.  This is outside forward() by design.
    tile = jax.block_until_ready(_run_fake_param_kernel(mod.fake_param))
    assert tile.shape == (8, 128) and tile.dtype == jnp.float32
    assert bool(jnp.all(tile == 0.0))

    out = mod(x, some_kwarg=123)
    assert out is None  # forward() returns None, matching torch semantics.

    print("KERNEL_OK")
</pallas_src>

<mosaic_0001>
module attributes {stable_mosaic.version = 11 : i64} {
  func.func @_fake_param_kernel(%arg0: memref<1xf32, #tpu.memory_space<smem>>, %arg1: memref<8x128xf32, #tpu.memory_space<vmem>>) attributes {dimension_semantics = [], scalar_prefetch = 0 : i64, scratch_operands = 0 : i64, tpu.core_type = #tpu.core_type<tc>} {
    %c0 = arith.constant 0 : index
    %0 = memref.load %arg0[%c0] : memref<1xf32, #tpu.memory_space<smem>>
    %1 = vector.broadcast %0 : f32 to vector<8x128xf32>
    %c0_0 = arith.constant 0 : index
    %c0_1 = arith.constant 0 : index
    %2 = vector.load %arg1[%c0_0, %c0_1] : memref<8x128xf32, #tpu.memory_space<vmem>>, vector<8x128xf32>
    tpu.vector_store %arg1[%c0_0, %c0_1], %1 {strides = array<i32>} : memref<8x128xf32, #tpu.memory_space<vmem>>, vector<8x128xf32>,
    return
  }
}

</mosaic_0001>

<llo_original>
// kernel: _run_fake_param_kernel.1
$region0: #{_run_fake_param_kernel.1}
  #allocation0 [shape = 'u32[]', space=smem, size = 0x4, offset = 0x4, fixed_abs, tag = 'smem constant byte address 0x4 - core index']
  #allocation1 [shape = 'u32[72,128]{1,0:T(1,128)}', space=vmem, size = 0x9000, scoped, tag = 'internal scratch']
  #allocation2 [shape = 'f32[1]{0:T(128)S(6)}', space=smem, size = 0x200, scoped, tag = 'scoped memory for _run_fake_param_kernel.1']
  %s0 = inlined_call_operand.<no memory space> [shape: f32[1], index: 0, kind: input, shape index: {}]
  %s1 = inlined_call_operand.hbm [shape: f32[8,128], index: 1, kind: output, shape index: {}]
  %s2 = sld [smem:[#allocation0]]
  $region14: #{_run_fake_param_kernel.1} parent=0
    _
  %s4 = ssub.s32 1, %s2
  %s5 = scalar_select 0, %s4, %s2
  %6 = sst [smem:[#allocation2]] %s0
  $region1: #{_run_fake_param_kernel.1} parent=0
    #allocation3 [shape = 'u8[4096]{0}', space=vmem, size = 0x1000, scoped, tag = 'output window, operand 0, single buffered']
    #allocation4 [shape = 's32[1]{0}', space=sflag, size = 0x4, scoped, tag = 'scoped memory for _run_fake_param_kernel.1']
    %7 = vsyncpa [#allocation4], 0
    // Predicated region
    $region2: #{_run_fake_param_kernel.1} parent=1 // pred_check
      _
    $region3: #{_run_fake_param_kernel.1} parent=1 // pred_check_branch
      %9 = sbr.rel (0) target = $region5
    $region4: #{_run_fake_param_kernel.1} parent=1 // pred_region
      _
    $region5: #{_run_fake_param_kernel.1} parent=1 // pred_fallthru
      _
    %s10 = sld [smem:[#allocation2]]
    %v11 = vstv %s10
    %12 = vst [vmem:[#allocation3] sm:$0xff] %v11
    // Predicated region
    $region6: #{_run_fake_param_kernel.1} parent=1 // pred_check
      _
    $region7: #{_run_fake_param_kernel.1} parent=1 // pred_check_branch
      %14 = sbr.rel (0) target = $region9
    $region8: #{_run_fake_param_kernel.1} parent=1 // pred_region
      %16 = vsyncadd [#allocation4], 0
      %s18 = sshll.u32 [#allocation3], 4
      %s19 = int_to_ptr.vmem [resolvable:$true] %s18
      %s20 = sshll.u32 %s1, 4
      %s21 = int_to_ptr.hbm [resolvable:$true] %s20
      %23 = dma.vmem_to_hbm [thread:$0]  %s19, 128, %s21, [#allocation4]
    $region9: #{_run_fake_param_kernel.1} parent=1 // pred_fallthru
      _
    // Predicated region
    $region10: #{_run_fake_param_kernel.1} parent=1 // pred_check
      _
    $region11: #{_run_fake_param_kernel.1} parent=1 // pred_check_branch
      %25 = sbr.rel (0) target = $region13
    $region12: #{_run_fake_param_kernel.1} parent=1 // pred_region
      %27 = dma.done [#allocation4], 128
    $region13: #{_run_fake_param_kernel.1} parent=1 // pred_fallthru
      _
    %28 = vsyncpa [#allocation4], 1

</llo_original>
